<compile_context>
chip_gen: v6e
topology: v6e:2x2x1
jax: 0.10.0
libtpu: 0.0.40
codegen_flags: <defaults>
</compile_context>

<pallas_src>
import jax
import jax.numpy as jnp
from jax.experimental import pallas as pl
from jax.experimental.pallas import tpu as pltpu

LANES = 128             # TPU lane width: fused hidden feature axis padded to this.
SUBLANES = 8            # f32 sublane granularity (row alignment of W1 slices).
TANH_GAIN = 5.0 / 3.0   # nn.init.calculate_gain('tanh')


def _round_up(x, m):
    return (x + m - 1) // m * m


def _padded_layout(comp_dims):
    """Sublane-aligned row offsets of each obs component inside the fused W1."""
    offs, off = [], 0
    for d in comp_dims:
        offs.append(off)
        off += _round_up(int(d), SUBLANES)
    return tuple(offs), off


def _vmem_limit_bytes():
    """Per-generation VMEM budget: ~3/4 of physical, capped at 100 MiB.
    -> ~96 MiB on v5e/v6e (128 MiB physical), ~48 MiB on v7x (64 MiB physical)."""
    cap = 64 * 1024 * 1024
    try:
        cap = int(getattr(pltpu.get_tpu_info(), "vmem_capacity_bytes", cap))
    except Exception:
        pass
    return min(cap * 3 // 4, 100 * 1024 * 1024)


def _choose_block_batch(batch, block_batch):
    """Large batch tiles to amortize the ~0.35 us/step grid overhead, but keep
    >=2 grid steps (both v7x TensorCores) and 8-row-aligned blocks."""
    if batch <= 2 * SUBLANES:
        return batch                                  # tiny: single step
    bb = min(block_batch, _round_up(pl.cdiv(batch, 2), SUBLANES))
    return max(SUBLANES, min(bb, batch))


def _const_spec(shape, index_map):
    """Weight/bias spec: constant index_map -> single-buffered (second pipeline
    buffer is dead weight).  Falls back to default buffering if this JAX build
    does not accept pipeline_mode."""
    try:
        return pl.BlockSpec(shape, index_map, pipeline_mode=pl.Buffered(1))
    except (TypeError, AttributeError):
        return pl.BlockSpec(shape, index_map)


# -----------------------------------------------------------------------------
# Kernel factory: fully fused actor+critic MLP forward.
# -----------------------------------------------------------------------------
def _make_kernel(row_offsets, comp_dims, n_hidden_blocks, out_lanes):
    n_comp = len(comp_dims)

    def kernel(*refs):
        obs_refs = refs[:n_comp]
        idx = n_comp
        w1_ref = refs[idx]; idx += 1
        wh_ref = None
        if n_hidden_blocks > 0:
            wh_ref = refs[idx]; idx += 1
        wo_ref = refs[idx]; idx += 1
        b_ref = refs[idx]; idx += 1
        out_ref = refs[idx]

        act_dtype = w1_ref.dtype   # compute dtype (bf16 by default)

        # ---- layer 1: ONE fused (actor|critic) matmul over the shared obs ----
        # dict concat -> sum of partial dots against sublane-aligned row slices
        # of the fused W1 (static aligned slices of a VMEM ref are free).
        # Obs cast to the weight dtype IN-KERNEL (free VPU op, single MXU pass).
        h = None
        for r, off, d in zip(obs_refs, row_offsets, comp_dims):
            part = jnp.dot(r[...].astype(act_dtype), w1_ref[off:off + d, :],
                           preferred_element_type=jnp.float32)
            h = part if h is None else h + part
        # bias add in f32 (accuracy), one cast, tanh in compute dtype (EUP work
        # halved for bf16 on v6e/v7x; pass f32 weights on v5e).
        h = jnp.tanh((h + b_ref[0:1, :]).astype(act_dtype))

        # ---- hidden layers: block-diagonal (actor|critic), lane-dense 128 ----
        for l in range(n_hidden_blocks):
            acc = jnp.dot(h, wh_ref[l], preferred_element_type=jnp.float32)
            h = jnp.tanh((acc + b_ref[l + 1:l + 2, :]).astype(act_dtype))

        # ---- output layer: block-diag (policy|value) -> narrow 16-lane slab ----
        out = (jnp.dot(h, wo_ref[...], preferred_element_type=jnp.float32)
               + b_ref[n_hidden_blocks + 1:n_hidden_blocks + 2, :out_lanes])
        out_ref[...] = out.astype(out_ref.dtype)

    return kernel


# -----------------------------------------------------------------------------
# pallas_call wrapper: batch-tiled grid, weights resident across batch blocks.
# -----------------------------------------------------------------------------
def actor_critic_pallas(obs_components, packed, *, block_batch=4096):
    """Returns a lane-dense (batch, out_lanes) f32 slab: policy in lanes
    [0:n_act), value in lanes [n_act:n_act+n_val)."""
    comp_dims = packed["comp_dims"]
    row_offsets = packed["row_offsets"]
    out_lanes = packed["out_lanes"]
    n_layers = packed["n_layers"]
    n_hidden_blocks = n_layers - 2
    w1, w_hidden, w_out, b = packed["w1"], packed["w_hidden"], packed["w_out"], packed["b"]

    assert tuple(int(c.shape[-1]) for c in obs_components) == comp_dims
    batch = int(obs_components[0].shape[0])

    bb = _choose_block_batch(batch, block_batch)
    grid = (pl.cdiv(batch, bb),)
    # NOTE: a partial final block computes on garbage rows but they are
    # row-independent and masked on the write-back, so results stay correct.

    obs_specs = [pl.BlockSpec((bb, d), lambda i: (i, 0)) for d in comp_dims]
    w_specs = [_const_spec(w1.shape, lambda i: (0, 0))]
    operands = list(obs_components) + [w1]
    if n_hidden_blocks > 0:
        w_specs.append(_const_spec(w_hidden.shape, lambda i: (0, 0, 0)))
        operands.append(w_hidden)
    w_specs.append(_const_spec(w_out.shape, lambda i: (0, 0)))
    operands.append(w_out)
    w_specs.append(_const_spec(b.shape, lambda i: (0, 0)))
    operands.append(b)
    out_spec = pl.BlockSpec((bb, out_lanes), lambda i: (i, 0))

    obs_dim = sum(comp_dims)
    weight_bytes = sum(int(w.size) * w.dtype.itemsize
                       for w in (w1, w_out, b) + ((w_hidden,) if w_hidden is not None else ()))
    cost = pl.CostEstimate(
        flops=2 * batch * (obs_dim * LANES + n_hidden_blocks * LANES * LANES
                           + LANES * out_lanes),
        transcendentals=batch * LANES * (n_layers - 1),
        bytes_accessed=int(sum(int(c.size) * c.dtype.itemsize for c in obs_components)
                           + weight_bytes + batch * out_lanes * 4),
    )

    return pl.pallas_call(
        _make_kernel(row_offsets, comp_dims, n_hidden_blocks, out_lanes),
        out_shape=jax.ShapeDtypeStruct((batch, out_lanes), jnp.float32),
        grid=grid,
        in_specs=obs_specs + w_specs,
        out_specs=out_spec,
        compiler_params=pltpu.CompilerParams(
            dimension_semantics=("parallel",),       # megacore / v7x 2-TC sharding
            vmem_limit_bytes=_vmem_limit_bytes(),    # per-generation budget
        ),
        cost_estimate=cost,
    )(*operands)


# -----------------------------------------------------------------------------
# Python wrapper reproducing ActorCriticTwoMLP.forward semantics.
# -----------------------------------------------------------------------------
def actor_critic_forward(observation, packed, detach_actor=False, detach_critic=False):
    """dict obs -> {'policy', 'value'}.

    detach_actor / detach_critic only change the BACKWARD pass (they stop
    gradients flowing into the encoder); forward values are identical, and this
    kernel is forward-only, so the flags do not alter the computation here.
    """
    # TODO(synk): wrap in jax.custom_vjp (pallas_call has no autodiff rule) and
    # apply stop_gradient per head on the observation cotangent so detach_* and
    # training through this module become meaningful.
    if isinstance(observation, dict):
        components = [v for _, v in observation.items()]
    else:
        components = [observation]
    out = actor_critic_pallas(components, packed)        # (batch, out_lanes) f32
    n_act, n_val = packed["n_act"], packed["n_val"]
    return {"policy": out[:, :n_act], "value": out[:, n_act:n_act + n_val]}


# -----------------------------------------------------------------------------
# Parameter init (mirrors torch: orthogonal weights w/ tanh gain, output_gain on
# the last layer, zero biases) and wrapper-side fused packing.
# -----------------------------------------------------------------------------
def init_mlp_params(key, input_size, hidden_size, output_size, n_layers, output_gain):
    """Weights stored (in_features, out_features) so the kernel does y = x@W + b."""
    assert n_layers >= 2  # TODO(synk): n_layers == 1 (single Linear, no act) not packed here
    dims = [input_size] + [hidden_size] * (n_layers - 1) + [output_size]
    keys = jax.random.split(key, n_layers)
    ws, bs = [], []
    for l in range(n_layers):
        gain = TANH_GAIN if l < n_layers - 1 else output_gain
        w = jax.nn.initializers.orthogonal(scale=gain)(
            keys[l], (dims[l], dims[l + 1]), jnp.float32)
        ws.append(w)
        bs.append(jnp.zeros((dims[l + 1],), jnp.float32))
    return ws, bs


def pack_params(actor_params, critic_params, comp_dims, compute_dtype=jnp.bfloat16):
    """Packs actor+critic weights into the fused, 128-lane-padded operands:
    fused W1 (sublane-aligned per-component row blocks), block-diagonal hidden
    stack, narrow output weight, and one packed f32 bias slab.

    compute_dtype: bf16 by default (MXU-native on all generations); pass
    jnp.float32 for exact-f32 or for v5e (no bf16 VPU/EUP)."""
    wa, ba = actor_params
    wc, bc = critic_params
    n_layers = len(wa)
    obs_dim, hidden = wa[0].shape
    comp_dims = tuple(int(d) for d in comp_dims)
    assert sum(comp_dims) == obs_dim
    n_act, n_val = wa[-1].shape[1], wc[-1].shape[1]
    out_lanes = max(SUBLANES, _round_up(n_act + n_val, SUBLANES))
    assert 2 * hidden <= LANES and out_lanes <= LANES, (
        "fused feature axes must fit one 128-lane tile")  # TODO(synk): tile wider heads

    # layer 1: column-concat (actor | critic), zero-pad to 128 lanes, rows of
    # each obs component placed at 8-row-aligned offsets (zero-padded rows).
    row_offsets, padded_rows = _padded_layout(comp_dims)
    w1 = jnp.zeros((padded_rows, LANES), compute_dtype)
    raw = 0
    for off, d in zip(row_offsets, comp_dims):
        w1 = w1.at[off:off + d, :hidden].set(wa[0][raw:raw + d].astype(compute_dtype))
        w1 = w1.at[off:off + d, hidden:2 * hidden].set(wc[0][raw:raw + d].astype(compute_dtype))
        raw += d

    # hidden layers 2..L-1: block-diagonal (actor | critic) in (128, 128).
    wh = []
    for l in range(1, n_layers - 1):
        blk = jnp.zeros((LANES, LANES), compute_dtype)
        blk = blk.at[:hidden, :hidden].set(wa[l].astype(compute_dtype))
        blk = blk.at[hidden:2 * hidden, hidden:2 * hidden].set(wc[l].astype(compute_dtype))
        wh.append(blk)
    w_hidden = jnp.stack(wh) if wh else None

    # output layer: block-diag (policy | value) in a narrow (128, out_lanes) tile.
    w_out = jnp.zeros((LANES, out_lanes), compute_dtype)
    w_out = w_out.at[:hidden, :n_act].set(wa[-1].astype(compute_dtype))
    w_out = w_out.at[hidden:2 * hidden, n_act:n_act + n_val].set(wc[-1].astype(compute_dtype))

    # all biases in one (n_layers, 128) f32 slab -> a single DMA, f32 adds.
    b = jnp.zeros((n_layers, LANES), jnp.float32)
    for l in range(n_layers - 1):
        b = b.at[l, :hidden].set(ba[l])
        b = b.at[l, hidden:2 * hidden].set(bc[l])
    b = b.at[n_layers - 1, :n_act].set(ba[-1])
    b = b.at[n_layers - 1, n_act:n_act + n_val].set(bc[-1])

    return dict(w1=w1, w_hidden=w_hidden, w_out=w_out, b=b,
                n_layers=n_layers, n_act=n_act, n_val=n_val, hidden=hidden,
                out_lanes=out_lanes, comp_dims=comp_dims, row_offsets=row_offsets)


if __name__ == "__main__":
    batch, hidden, n_actions, n_layers = 8, 32, 8, 3   # torch default n_layers=3
    key = jax.random.PRNGKey(0)
    k_s, k_g, k_a, k_c, k_s2, k_g2 = jax.random.split(key, 6)

    comp_dims = (24, 12)   # 12 exercises the sublane-padded W1 layout
    observation = {
        "state": jax.random.normal(k_s, (batch, comp_dims[0]), jnp.float32),
        "goal": jax.random.normal(k_g, (batch, comp_dims[1]), jnp.float32),
    }
    obs_dim = sum(comp_dims)

    actor_params = init_mlp_params(k_a, obs_dim, hidden, n_actions, n_layers, output_gain=0.01)
    critic_params = init_mlp_params(k_c, obs_dim, hidden, 1, n_layers, output_gain=1.0)

    # plain-JAX reference: the un-fused torch forward (concat + two separate MLPs)
    def mlp_ref(x, params):
        ws, bs = params
        for w, bias in zip(ws[:-1], bs[:-1]):
            x = jnp.tanh(x @ w + bias)
        return x @ ws[-1] + bs[-1]

    obs_cat = jnp.concatenate([v for _, v in observation.items()], axis=-1)
    pol_ref = mlp_ref(obs_cat, actor_params)
    val_ref = mlp_ref(obs_cat, critic_params)

    # --- exact f32 path ---
    packed_f32 = pack_params(actor_params, critic_params, comp_dims, compute_dtype=jnp.float32)
    result = actor_critic_forward(observation, packed_f32, detach_actor=False, detach_critic=True)
    jax.block_until_ready(result)
    assert result["policy"].shape == (batch, n_actions)
    assert result["value"].shape == (batch, 1)
    assert jnp.allclose(result["policy"], pol_ref, atol=1e-4)
    assert jnp.allclose(result["value"], val_ref, atol=1e-4)

    # --- default bf16 path (bf16 MXU + bf16 tanh, f32 accumulation/bias) ---
    packed_bf16 = pack_params(actor_params, critic_params, comp_dims)
    result16 = actor_critic_forward(observation, packed_bf16)
    jax.block_until_ready(result16)
    assert result16["policy"].shape == (batch, n_actions)
    assert result16["value"].shape == (batch, 1)
    assert jnp.allclose(result16["policy"], pol_ref, atol=5e-2)
    assert jnp.allclose(result16["value"], val_ref, atol=1e-1)   # bf16 obs/act quantization

    # --- multi-step grid + partial final block (2 parallel steps, masked tail) ---
    batch2 = 40
    obs2 = {"state": jax.random.normal(k_s2, (batch2, comp_dims[0]), jnp.float32),
            "goal": jax.random.normal(k_g2, (batch2, comp_dims[1]), jnp.float32)}
    obs2_cat = jnp.concatenate([obs2["state"], obs2["goal"]], axis=-1)
    result2 = actor_critic_forward(obs2, packed_f32)
    jax.block_until_ready(result2)
    assert jnp.allclose(result2["policy"], mlp_ref(obs2_cat, actor_params), atol=1e-4)
    assert jnp.allclose(result2["value"], mlp_ref(obs2_cat, critic_params), atol=1e-4)

    print("KERNEL_OK")
</pallas_src>

<mosaic_0001>
module attributes {stable_mosaic.version = 11 : i64} {
  func.func @kernel(%arg0: i32, %arg1: memref<8x24xf32, #tpu.memory_space<vmem>>, %arg2: memref<8x12xf32, #tpu.memory_space<vmem>>, %arg3: memref<40x128xf32, #tpu.memory_space<vmem>>, %arg4: memref<1x128x128xf32, #tpu.memory_space<vmem>>, %arg5: memref<128x16xf32, #tpu.memory_space<vmem>>, %arg6: memref<3x128xf32, #tpu.memory_space<vmem>>, %arg7: memref<8x16xf32, #tpu.memory_space<vmem>>) attributes {dimension_semantics = [#tpu.dimension_semantics<parallel>], iteration_bounds = array<i64: 1>, scalar_prefetch = 0 : i64, scratch_operands = 0 : i64, tpu.core_type = #tpu.core_type<tc>, window_params = [{transform_indices = @transform_0, window_bounds = array<i64: 8, 24>}, {transform_indices = @transform_1, window_bounds = array<i64: 8, 12>}, {pipeline_mode = #tpu.pipeline_mode<synchronous>, transform_indices = @transform_2, window_bounds = array<i64: 40, 128>}, {pipeline_mode = #tpu.pipeline_mode<synchronous>, transform_indices = @transform_3, window_bounds = array<i64: 1, 128, 128>}, {pipeline_mode = #tpu.pipeline_mode<synchronous>, transform_indices = @transform_4, window_bounds = array<i64: 128, 16>}, {pipeline_mode = #tpu.pipeline_mode<synchronous>, transform_indices = @transform_5, window_bounds = array<i64: 3, 128>}, {transform_indices = @transform_6, window_bounds = array<i64: 8, 16>}]} {
    %c0 = arith.constant 0 : index
    %c0_0 = arith.constant 0 : index
    %0 = vector.load %arg1[%c0, %c0_0] : memref<8x24xf32, #tpu.memory_space<vmem>>, vector<8x24xf32>
    %c0_1 = arith.constant 0 : index
    %c0_2 = arith.constant 0 : index
    %1 = vector.load %arg3[%c0_1, %c0_2] : memref<40x128xf32, #tpu.memory_space<vmem>>, vector<24x128xf32>
    %cst = arith.constant dense<0.000000e+00> : vector<8x128xf32>
    %2 = tpu.matmul %0, %1, %cst {dimension_numbers = #tpu.dot_dimension_numbers<[1], [0], [0], [1], [0, 0, 1, 1], [], []>} : vector<8x24xf32>, vector<24x128xf32>, vector<8x128xf32> -> vector<8x128xf32>
    %c0_3 = arith.constant 0 : index
    %c0_4 = arith.constant 0 : index
    %3 = vector.load %arg2[%c0_3, %c0_4] : memref<8x12xf32, #tpu.memory_space<vmem>>, vector<8x12xf32>
    %c24 = arith.constant 24 : index
    %c0_5 = arith.constant 0 : index
    %4 = vector.load %arg3[%c24, %c0_5] : memref<40x128xf32, #tpu.memory_space<vmem>>, vector<12x128xf32>
    %cst_6 = arith.constant dense<0.000000e+00> : vector<8x128xf32>
    %5 = tpu.matmul %3, %4, %cst_6 {dimension_numbers = #tpu.dot_dimension_numbers<[1], [0], [0], [1], [0, 0, 1, 1], [], []>} : vector<8x12xf32>, vector<12x128xf32>, vector<8x128xf32> -> vector<8x128xf32>
    %6 = arith.addf %2, %5 : vector<8x128xf32>
    %c0_7 = arith.constant 0 : index
    %c0_8 = arith.constant 0 : index
    %7 = vector.load %arg6[%c0_7, %c0_8] : memref<3x128xf32, #tpu.memory_space<vmem>>, vector<1x128xf32>
    %8 = vector.broadcast %7 : vector<1x128xf32> to vector<8x128xf32>
    %9 = arith.addf %6, %8 : vector<8x128xf32>
    %10 = math.tanh %9 : vector<8x128xf32>
    %c0_9 = arith.constant 0 : index
    %c0_10 = arith.constant 0 : index
    %c0_11 = arith.constant 0 : index
    %11 = vector.load %arg4[%c0_9, %c0_10, %c0_11] : memref<1x128x128xf32, #tpu.memory_space<vmem>>, vector<1x128x128xf32>
    %12 = vector.shape_cast %11 : vector<1x128x128xf32> to vector<128x128xf32>
    %cst_12 = arith.constant dense<0.000000e+00> : vector<8x128xf32>
    %13 = tpu.matmul %10, %12, %cst_12 {dimension_numbers = #tpu.dot_dimension_numbers<[1], [0], [0], [1], [0, 0, 1, 1], [], []>} : vector<8x128xf32>, vector<128x128xf32>, vector<8x128xf32> -> vector<8x128xf32>
    %c1 = arith.constant 1 : index
    %c0_13 = arith.constant 0 : index
    %14 = vector.load %arg6[%c1, %c0_13] : memref<3x128xf32, #tpu.memory_space<vmem>>, vector<1x128xf32>
    %15 = vector.broadcast %14 : vector<1x128xf32> to vector<8x128xf32>
    %16 = arith.addf %13, %15 : vector<8x128xf32>
    %17 = math.tanh %16 : vector<8x128xf32>
    %c0_14 = arith.constant 0 : index
    %c0_15 = arith.constant 0 : index
    %18 = vector.load %arg5[%c0_14, %c0_15] : memref<128x16xf32, #tpu.memory_space<vmem>>, vector<128x16xf32>
    %cst_16 = arith.constant dense<0.000000e+00> : vector<8x16xf32>
    %19 = tpu.matmul %17, %18, %cst_16 {dimension_numbers = #tpu.dot_dimension_numbers<[1], [0], [0], [1], [0, 0, 1, 1], [], []>} : vector<8x128xf32>, vector<128x16xf32>, vector<8x16xf32> -> vector<8x16xf32>
    %c2 = arith.constant 2 : index
    %c0_17 = arith.constant 0 : index
    %20 = vector.load %arg6[%c2, %c0_17] : memref<3x128xf32, #tpu.memory_space<vmem>>, vector<1x16xf32>
    %21 = vector.broadcast %20 : vector<1x16xf32> to vector<8x16xf32>
    %22 = arith.addf %19, %21 : vector<8x16xf32>
    %c0_18 = arith.constant 0 : index
    %c0_19 = arith.constant 0 : index
    %23 = vector.load %arg7[%c0_18, %c0_19] : memref<8x16xf32, #tpu.memory_space<vmem>>, vector<8x16xf32>
    tpu.vector_store %arg7[%c0_18, %c0_19], %22 {strides = array<i32>} : memref<8x16xf32, #tpu.memory_space<vmem>>, vector<8x16xf32>,
    return
  }
  func.func @transform_0(%arg0: i32) -> (i32, i32) {
    %c0_i32 = arith.constant 0 : i32
    %c0_i32_0 = arith.constant 0 : i32
    return %arg0, %c0_i32 : i32, i32
  }
  func.func @transform_1(%arg0: i32) -> (i32, i32) {
    %c0_i32 = arith.constant 0 : i32
    %c0_i32_0 = arith.constant 0 : i32
    return %arg0, %c0_i32 : i32, i32
  }
  func.func @transform_2(%arg0: i32) -> (i32, i32) {
    %c0_i32 = arith.constant 0 : i32
    %c0_i32_0 = arith.constant 0 : i32
    %c0_i32_1 = arith.constant 0 : i32
    return %c0_i32, %c0_i32_0 : i32, i32
  }
  func.func @transform_3(%arg0: i32) -> (i32, i32, i32) {
    %c0_i32 = arith.constant 0 : i32
    %c0_i32_0 = arith.constant 0 : i32
    %c0_i32_1 = arith.constant 0 : i32
    %c0_i32_2 = arith.constant 0 : i32
    return %c0_i32, %c0_i32_0, %c0_i32_1 : i32, i32, i32
  }
  func.func @transform_4(%arg0: i32) -> (i32, i32) {
    %c0_i32 = arith.constant 0 : i32
    %c0_i32_0 = arith.constant 0 : i32
    %c0_i32_1 = arith.constant 0 : i32
    return %c0_i32, %c0_i32_0 : i32, i32
  }
  func.func @transform_5(%arg0: i32) -> (i32, i32) {
    %c0_i32 = arith.constant 0 : i32
    %c0_i32_0 = arith.constant 0 : i32
    %c0_i32_1 = arith.constant 0 : i32
    return %c0_i32, %c0_i32_0 : i32, i32
  }
  func.func @transform_6(%arg0: i32) -> (i32, i32) {
    %c0_i32 = arith.constant 0 : i32
    %c0_i32_0 = arith.constant 0 : i32
    return %arg0, %c0_i32 : i32, i32
  }
}

</mosaic_0001>

<llo_original>
// kernel: tpu_custom_call.1
$region0: #{tpu_custom_call.1}
  #allocation0 [shape = 'u32[]', space=smem, size = 0x4, offset = 0x4, fixed_abs, tag = 'smem constant byte address 0x4 - core index']
  #allocation1 [shape = 'u32[144,128]{1,0:T(1,128)}', space=vmem, size = 0x12000, scoped, tag = 'internal scratch']
  %s0 = inlined_call_operand.vmem [shape: f32[8,24], index: 0, kind: input, shape index: {}]
  %s1 = inlined_call_operand.vmem [shape: f32[8,12], index: 1, kind: input, shape index: {}]
  %s2 = inlined_call_operand.hbm [shape: f32[40,128], index: 2, kind: input, shape index: {}]
  %s3 = inlined_call_operand.vmem [shape: f32[1,128,128], index: 3, kind: input, shape index: {}]
  %s4 = inlined_call_operand.vmem [shape: f32[128,16], index: 4, kind: input, shape index: {}]
  %s5 = inlined_call_operand.vmem [shape: f32[3,128], index: 5, kind: input, shape index: {}]
  %s6 = inlined_call_operand.hbm [shape: f32[8,16], index: 6, kind: output, shape index: {}]
  %s7 = sld [smem:[#allocation0]]
  $region38: #{tpu_custom_call.1} parent=0
    _
  %s9 = ssub.s32 1, %s7
  %s10 = scalar_select 0, %s9, %s7
  $region1: #{tpu_custom_call.1} parent=0
    #allocation2 [shape = 'u8[20480]{0}', space=vmem, size = 0x5000, scoped, tag = 'input window, operand 2, single buffered']
    #allocation3 [shape = 's32[1]{0}', space=sflag, size = 0x4, scoped, tag = 'scoped memory for tpu_custom_call.1']
    #allocation4 [shape = 's32[1]{0}', space=sflag, size = 0x4, scoped, tag = 'scoped memory for tpu_custom_call.1']
    #allocation5 [shape = 'u8[4096]{0}', space=vmem, size = 0x1000, scoped, tag = 'output window, operand 0, single buffered']
    %11 = vsyncpa [#allocation3], 0
    %12 = vsyncpa [#allocation4], 0
    // Predicated region
    $region2: #{tpu_custom_call.1} parent=1 // pred_check
      _
    $region3: #{tpu_custom_call.1} parent=1 // pred_check_branch
      %14 = sbr.rel (0) target = $region5
    $region4: #{tpu_custom_call.1} parent=1 // pred_region
      _
    $region5: #{tpu_custom_call.1} parent=1 // pred_fallthru
      _
    // Predicated region
    $region6: #{tpu_custom_call.1} parent=1 // pred_check
      _
    $region7: #{tpu_custom_call.1} parent=1 // pred_check_branch
      %16 = sbr.rel (0) target = $region9
    $region8: #{tpu_custom_call.1} parent=1 // pred_region
      _
    $region9: #{tpu_custom_call.1} parent=1 // pred_fallthru
      _
    // Predicated region
    $region10: #{tpu_custom_call.1} parent=1 // pred_check
      _
    $region11: #{tpu_custom_call.1} parent=1 // pred_check_branch
      %18 = sbr.rel (0) target = $region13
    $region12: #{tpu_custom_call.1} parent=1 // pred_region
      %s20 = ssub.s32 640, 640
      %21 = vsyncadd [#allocation3], %s20
      %s22 = sshll.u32 [#allocation2], 4
      %s23 = int_to_ptr.vmem [resolvable:$true] %s22
      %28 = dma.hbm_to_vmem [thread:$0]  %s2, 640, %s23, [#allocation3], 128, 128, 8
    $region13: #{tpu_custom_call.1} parent=1 // pred_fallthru
      _
    // Predicated region
    $region14: #{tpu_custom_call.1} parent=1 // pred_check
      _
    $region15: #{tpu_custom_call.1} parent=1 // pred_check_branch
      %30 = sbr.rel (0) target = $region17
    $region16: #{tpu_custom_call.1} parent=1 // pred_region
      _
    $region17: #{tpu_custom_call.1} parent=1 // pred_fallthru
      _
    // Predicated region
    $region18: #{tpu_custom_call.1} parent=1 // pred_check
      _
    $region19: #{tpu_custom_call.1} parent=1 // pred_check_branch
      %32 = sbr.rel (0) target = $region21
    $region20: #{tpu_custom_call.1} parent=1 // pred_region
      _
    $region21: #{tpu_custom_call.1} parent=1 // pred_fallthru
      _
    // Predicated region
    $region22: #{tpu_custom_call.1} parent=1 // pred_check
      _
    $region23: #{tpu_custom_call.1} parent=1 // pred_check_branch
      %34 = sbr.rel (0) target = $region25
    $region24: #{tpu_custom_call.1} parent=1 // pred_region
      _
    $region25: #{tpu_custom_call.1} parent=1 // pred_fallthru
      _
    // Predicated region
    $region26: #{tpu_custom_call.1} parent=1 // pred_check
      _
    $region27: #{tpu_custom_call.1} parent=1 // pred_check_branch
      %36 = sbr.rel (0) target = $region29
    $region28: #{tpu_custom_call.1} parent=1 // pred_region
      %37 = dma.done [#allocation3], 640
    $region29: #{tpu_custom_call.1} parent=1 // pred_fallthru
      _
    %v38 = vld [vmem:[%s0] sm:$0xff]
    %v39 = vld [vmem:[#allocation2] sm:$0xff]
    %v40 = vld [vmem:[#allocation2 + $0x8] sm:$0xff]
    %v41 = vld [vmem:[#allocation2 + $0x10] sm:$0xff]
    %v42 = vld [vmem:[%s1] sm:$0xff]
    %v43 = vld [vmem:[#allocation2 + $0x18] sm:$0xff]
    %v44 = vld [vmem:[#allocation2 + $0x20] sm:$0xf]
    %vm45 = vcmask 97280
    %v47 = vsel %vm45, %v42, 0
    %vm49 = vcmask 1043456
    %v51 = vsel %vm49, %v44, 0
    %53 = vmatprep.subr.mxu0 0.0
    %54 = vmatpush1.msra.mxu0 0.0
    %55 = vmatprep.subr.mxu0 0.0
    %56 = vmatpush1.msra.mxu0 0.0
    %57 = vmatprep.subr.mxu0 0.0
    %58 = vmatpush1.msra.mxu0 0.0
    %59 = vmatprep.subr.mxu0 0.0
    %60 = vmatpush1.msra.mxu0 0.0
    %61 = vmatprep.subr.mxu0 0.0
    %62 = vmatpush1.msra.mxu0 0.0
    %63 = vmatprep.subr.mxu0 0.0
    %64 = vmatpush1.msra.mxu0 0.0
    %65 = vmatprep.subr.mxu0 0.0
    %66 = vmatpush1.msra.mxu0 0.0
    %67 = vmatprep.subr.mxu0 0.0
    %68 = vmatpush1.msra.mxu0 0.0
    %69 = vmatprep.subr.mxu0 0.0
    %70 = vmatpush1.msra.mxu0 0.0
    %71 = vmatprep.subr.mxu0 0.0
    %72 = vmatpush1.msra.mxu0 0.0
    %73 = vmatprep.subr.mxu0 0.0
    %74 = vmatpush1.msra.mxu0 0.0
    %75 = vmatprep.subr.mxu0 0.0
    %76 = vmatpush1.msra.mxu0 0.0
    %77 = vmatprep.subr.mxu0 0.0
    %78 = vmatpush1.msra.mxu0 0.0
    %79 = vmatprep.subr.mxu0 0.0
    %80 = vmatpush1.msra.mxu0 0.0
    %81 = vmatprep.subr.mxu0 0.0
    %82 = vmatpush1.msra.mxu0 %v51
    %83 = vmatprep.subr.mxu0 0.0
    %84 = vmatpush1.msra.mxu0 %v43
    %85 = vmatprep.subr.mxu0 0.0
    %86 = vmatpush2.msra.mxu0 0.0
    %87 = vmatprep.subr.mxu0 0.0
    %88 = vmatpush2.msra.mxu0 0.0
    %89 = vmatprep.subr.mxu0 0.0
    %90 = vmatpush2.msra.mxu0 0.0
    %91 = vmatprep.subr.mxu0 0.0
    %92 = vmatpush2.msra.mxu0 0.0
    %93 = vmatprep.subr.mxu0 0.0
    %94 = vmatpush2.msra.mxu0 0.0
    %95 = vmatprep.subr.mxu0 0.0
    %96 = vmatpush2.msra.mxu0 0.0
    %97 = vmatprep.subr.mxu0 0.0
    %98 = vmatpush2.msra.mxu0 0.0
    %99 = vmatprep.subr.mxu0 0.0
    %100 = vmatpush2.msra.mxu0 0.0
    %101 = vmatprep.subr.mxu0 0.0
    %102 = vmatpush2.msra.mxu0 0.0
    %103 = vmatprep.subr.mxu0 0.0
    %104 = vmatpush2.msra.mxu0 0.0
    %105 = vmatprep.subr.mxu0 0.0
    %106 = vmatpush2.msra.mxu0 0.0
    %107 = vmatprep.subr.mxu0 0.0
    %108 = vmatpush2.msra.mxu0 0.0
    %109 = vmatprep.subr.mxu0 0.0
    %110 = vmatpush2.msra.mxu0 0.0
    %111 = vmatprep.subr.mxu0 0.0
    %112 = vmatpush2.msra.mxu0 0.0
    %113 = vmatprep.subr.mxu0 0.0
    %114 = vmatpush2.msra.mxu0 0.0
    %115 = vmatprep.subr.mxu0 0.0
    %116 = vmatpush2.msra.mxu0 0.0
    %117 = vmatprep.mubr.f32.mxu0 0.0
    %118 = vmatmul.mubr.f32.gmra.mxu0 %v47
    %v119 = vpop.f32.mrf.mxu0
    %v120 = vadd.f32 0.0, %v119
    %v121 = vpop.f32.mrf.mxu0
    %122 = vdwg.mxu0
    %vm123 = vcmask 195584
    %v125 = vsel %vm123, %v38, 0
    %127 = vmatprep.subr.mxu0 0.0
    %128 = vmatpush1.msra.mxu0 0.0
    %129 = vmatprep.subr.mxu0 0.0
    %130 = vmatpush1.msra.mxu0 0.0
    %131 = vmatprep.subr.mxu0 0.0
    %132 = vmatpush1.msra.mxu0 0.0
    %133 = vmatprep.subr.mxu0 0.0
    %134 = vmatpush1.msra.mxu0 0.0
    %135 = vmatprep.subr.mxu0 0.0
    %136 = vmatpush1.msra.mxu0 0.0
    %137 = vmatprep.subr.mxu0 0.0
    %138 = vmatpush1.msra.mxu0 0.0
    %139 = vmatprep.subr.mxu0 0.0
    %140 = vmatpush1.msra.mxu0 0.0
    %141 = vmatprep.subr.mxu0 0.0
    %142 = vmatpush1.msra.mxu0 0.0
    %143 = vmatprep.subr.mxu0 0.0
    %144 = vmatpush1.msra.mxu0 0.0
    %145 = vmatprep.subr.mxu0 0.0
    %146 = vmatpush1.msra.mxu0 0.0
    %147 = vmatprep.subr.mxu0 0.0
    %148 = vmatpush1.msra.mxu0 0.0
    %149 = vmatprep.subr.mxu0 0.0
    %150 = vmatpush1.msra.mxu0 0.0
    %151 = vmatprep.subr.mxu0 0.0
    %152 = vmatpush1.msra.mxu0 0.0
    %153 = vmatprep.subr.mxu0 0.0
    %154 = vmatpush1.msra.mxu0 %v41
    %155 = vmatprep.subr.mxu0 0.0
    %156 = vmatpush1.msra.mxu0 %v40
    %157 = vmatprep.subr.mxu0 0.0
    %158 = vmatpush1.msra.mxu0 %v39
    %159 = vmatprep.subr.mxu0 0.0
    %160 = vmatpush2.msra.mxu0 0.0
    %161 = vmatprep.subr.mxu0 0.0
    %162 = vmatpush2.msra.mxu0 0.0
    %163 = vmatprep.subr.mxu0 0.0
    %164 = vmatpush2.msra.mxu0 0.0
    %165 = vmatprep.subr.mxu0 0.0
    %166 = vmatpush2.msra.mxu0 0.0
    %167 = vmatprep.subr.mxu0 0.0
    %168 = vmatpush2.msra.mxu0 0.0
    %169 = vmatprep.subr.mxu0 0.0
    %170 = vmatpush2.msra.mxu0 0.0
    %171 = vmatprep.subr.mxu0 0.0
    %172 = vmatpush2.msra.mxu0 0.0
    %173 = vmatprep.subr.mxu0 0.0
    %174 = vmatpush2.msra.mxu0 0.0
    %175 = vmatprep.subr.mxu0 0.0
    %176 = vmatpush2.msra.mxu0 0.0
    %177 = vmatprep.subr.mxu0 0.0
    %178 = vmatpush2.msra.mxu0 0.0
    %179 = vmatprep.subr.mxu0 0.0
    %180 = vmatpush2.msra.mxu0 0.0
    %181 = vmatprep.subr.mxu0 0.0
    %182 = vmatpush2.msra.mxu0 0.0
    %183 = vmatprep.subr.mxu0 0.0
    %184 = vmatpush2.msra.mxu0 0.0
    %185 = vmatprep.subr.mxu0 0.0
    %186 = vmatpush2.msra.mxu0 0.0
    %187 = vmatprep.subr.mxu0 0.0
    %188 = vmatpush2.msra.mxu0 0.0
    %189 = vmatprep.subr.mxu0 0.0
    %190 = vmatpush2.msra.mxu0 0.0
    %191 = vmatprep.mubr.f32.mxu0 0.0
    %192 = vmatmul.mubr.f32.gmra.mxu0 %v125
    %v193 = vpop.f32.mrf.mxu0
    %v194 = vadd.f32 %v120, %v193
    %v195 = vpop.f32.mrf.mxu0
    %196 = vdwg.mxu0
    %v197 = vld [vmem:[%s5] sm:$0x1]
    %v198 = vlaneseq
    %v199 = vshrl.u32 %v198, 7
    %v200 = vsub.s32 0, %v199
    %v201 = vrot.slane %v197, %v200
    %v202 = vadd.f32 %v194, %v201
    %v203 = vtanh.pop %v202
    %v204 = vld [vmem:[%s3] sm:$0xff]
    %v205 = vld [vmem:[%s3 + $0x8] sm:$0xff]
    %v206 = vld [vmem:[%s3 + $0x10] sm:$0xff]
    %v207 = vld [vmem:[%s3 + $0x18] sm:$0xff]
    %v208 = vld [vmem:[%s3 + $0x20] sm:$0xff]
    %v209 = vld [vmem:[%s3 + $0x28] sm:$0xff]
    %v210 = vld [vmem:[%s3 + $0x30] sm:$0xff]
    %v211 = vld [vmem:[%s3 + $0x38] sm:$0xff]
    %v212 = vld [vmem:[%s3 + $0x40] sm:$0xff]
    %v213 = vld [vmem:[%s3 + $0x48] sm:$0xff]
    %v214 = vld [vmem:[%s3 + $0x50] sm:$0xff]
    %v215 = vld [vmem:[%s3 + $0x58] sm:$0xff]
    %v216 = vld [vmem:[%s3 + $0x60] sm:$0xff]
    %v217 = vld [vmem:[%s3 + $0x68] sm:$0xff]
    %v218 = vld [vmem:[%s3 + $0x70] sm:$0xff]
    %v219 = vld [vmem:[%s3 + $0x78] sm:$0xff]
    %v220 = vld [vmem:[%s5 + $0x1] sm:$0x1]
    %v221 = vlaneseq
    %v222 = vshrl.u32 %v221, 7
    %v223 = vsub.s32 0, %v222
    %v224 = vrot.slane %v220, %v223
    %225 = vmatprep.subr.mxu0 0.0
    %226 = vmatpush1.msra.mxu0 %v219
    %227 = vmatprep.subr.mxu0 0.0
    %228 = vmatpush1.msra.mxu0 %v218
    %229 = vmatprep.subr.mxu0 0.0
    %230 = vmatpush1.msra.mxu0 %v217
    %231 = vmatprep.subr.mxu0 0.0
    %232 = vmatpush1.msra.mxu0 %v216
    %233 = vmatprep.subr.mxu0 0.0
    %234 = vmatpush1.msra.mxu0 %v215
    %235 = vmatprep.subr.mxu0 0.0
    %236 = vmatpush1.msra.mxu0 %v214
    %237 = vmatprep.subr.mxu0 0.0
    %238 = vmatpush1.msra.mxu0 %v213
    %239 = vmatprep.subr.mxu0 0.0
    %240 = vmatpush1.msra.mxu0 %v212
    %241 = vmatprep.subr.mxu0 0.0
    %242 = vmatpush1.msra.mxu0 %v211
    %243 = vmatprep.subr.mxu0 0.0
    %244 = vmatpush1.msra.mxu0 %v210
    %245 = vmatprep.subr.mxu0 0.0
    %246 = vmatpush1.msra.mxu0 %v209
    %247 = vmatprep.subr.mxu0 0.0
    %248 = vmatpush1.msra.mxu0 %v208
    %249 = vmatprep.subr.mxu0 0.0
    %250 = vmatpush1.msra.mxu0 %v207
    %251 = vmatprep.subr.mxu0 0.0
    %252 = vmatpush1.msra.mxu0 %v206
    %253 = vmatprep.subr.mxu0 0.0
    %254 = vmatpush1.msra.mxu0 %v205
    %255 = vmatprep.subr.mxu0 0.0
    %256 = vmatpush1.msra.mxu0 %v204
    %257 = vmatprep.subr.mxu0 0.0
    %258 = vmatpush2.msra.mxu0 0.0
    %259 = vmatprep.subr.mxu0 0.0
    %260 = vmatpush2.msra.mxu0 0.0
    %261 = vmatprep.subr.mxu0 0.0
    %262 = vmatpush2.msra.mxu0 0.0
    %263 = vmatprep.subr.mxu0 0.0
    %264 = vmatpush2.msra.mxu0 0.0
    %265 = vmatprep.subr.mxu0 0.0
    %266 = vmatpush2.msra.mxu0 0.0
    %267 = vmatprep.subr.mxu0 0.0
    %268 = vmatpush2.msra.mxu0 0.0
    %269 = vmatprep.subr.mxu0 0.0
    %270 = vmatpush2.msra.mxu0 0.0
    %271 = vmatprep.subr.mxu0 0.0
    %272 = vmatpush2.msra.mxu0 0.0
    %273 = vmatprep.subr.mxu0 0.0
    %274 = vmatpush2.msra.mxu0 0.0
    %275 = vmatprep.subr.mxu0 0.0
    %276 = vmatpush2.msra.mxu0 0.0
    %277 = vmatprep.subr.mxu0 0.0
    %278 = vmatpush2.msra.mxu0 0.0
    %279 = vmatprep.subr.mxu0 0.0
    %280 = vmatpush2.msra.mxu0 0.0
    %281 = vmatprep.subr.mxu0 0.0
    %282 = vmatpush2.msra.mxu0 0.0
    %283 = vmatprep.subr.mxu0 0.0
    %284 = vmatpush2.msra.mxu0 0.0
    %285 = vmatprep.subr.mxu0 0.0
    %286 = vmatpush2.msra.mxu0 0.0
    %287 = vmatprep.subr.mxu0 0.0
    %288 = vmatpush2.msra.mxu0 0.0
    %289 = vmatprep.mubr.f32.mxu0 0.0
    %290 = vmatmul.mubr.f32.gmra.mxu0 %v203
    %v291 = vpop.f32.mrf.mxu0
    %v292 = vadd.f32 %v224, %v291
    %v293 = vpop.f32.mrf.mxu0
    %294 = vdwg.mxu0
    %v295 = vtanh.pop %v292
    %v296 = vld [vmem:[%s4] sm:$0xff]
    %v297 = vld [vmem:[%s4 + $0x8] sm:$0xff]
    %v298 = vld [vmem:[%s4 + $0x10] sm:$0xff]
    %v299 = vld [vmem:[%s4 + $0x18] sm:$0xff]
    %v300 = vld [vmem:[%s4 + $0x20] sm:$0xff]
    %v301 = vld [vmem:[%s4 + $0x28] sm:$0xff]
    %v302 = vld [vmem:[%s4 + $0x30] sm:$0xff]
    %v303 = vld [vmem:[%s4 + $0x38] sm:$0xff]
    %v304 = vld [vmem:[%s4 + $0x40] sm:$0xff]
    %v305 = vld [vmem:[%s4 + $0x48] sm:$0xff]
    %v306 = vld [vmem:[%s4 + $0x50] sm:$0xff]
    %v307 = vld [vmem:[%s4 + $0x58] sm:$0xff]
    %v308 = vld [vmem:[%s4 + $0x60] sm:$0xff]
    %v309 = vld [vmem:[%s4 + $0x68] sm:$0xff]
    %v310 = vld [vmem:[%s4 + $0x70] sm:$0xff]
    %v311 = vld [vmem:[%s4 + $0x78] sm:$0xff]
    %v312 = vld [vmem:[%s5 + $0x2] sm:$0x1]
    %v313 = vlaneseq
    %v314 = vshrl.u32 %v313, 7
    %v315 = vsub.s32 0, %v314
    %v316 = vrot.slane %v312, %v315
    %317 = vmatprep.subr.mxu0 0.0
    %318 = vmatpush1.msra.mxu0 %v311
    %319 = vmatprep.subr.mxu0 0.0
    %320 = vmatpush1.msra.mxu0 %v310
    %321 = vmatprep.subr.mxu0 0.0
    %322 = vmatpush1.msra.mxu0 %v309
    %323 = vmatprep.subr.mxu0 0.0
    %324 = vmatpush1.msra.mxu0 %v308
    %325 = vmatprep.subr.mxu0 0.0
    %326 = vmatpush1.msra.mxu0 %v307
    %327 = vmatprep.subr.mxu0 0.0
    %328 = vmatpush1.msra.mxu0 %v306
    %329 = vmatprep.subr.mxu0 0.0
    %330 = vmatpush1.msra.mxu0 %v305
    %331 = vmatprep.subr.mxu0 0.0
    %332 = vmatpush1.msra.mxu0 %v304
    %333 = vmatprep.subr.mxu0 0.0
    %334 = vmatpush1.msra.mxu0 %v303
    %335 = vmatprep.subr.mxu0 0.0
    %336 = vmatpush1.msra.mxu0 %v302
    %337 = vmatprep.subr.mxu0 0.0
    %338 = vmatpush1.msra.mxu0 %v301
    %339 = vmatprep.subr.mxu0 0.0
    %340 = vmatpush1.msra.mxu0 %v300
    %341 = vmatprep.subr.mxu0 0.0
    %342 = vmatpush1.msra.mxu0 %v299
    %343 = vmatprep.subr.mxu0 0.0
    %344 = vmatpush1.msra.mxu0 %v298
    %345 = vmatprep.subr.mxu0 0.0
    %346 = vmatpush1.msra.mxu0 %v297
    %347 = vmatprep.subr.mxu0 0.0
    %348 = vmatpush1.msra.mxu0 %v296
    %349 = vmatprep.subr.mxu0 0.0
    %350 = vmatpush2.msra.mxu0 0.0
    %351 = vmatprep.subr.mxu0 0.0
    %352 = vmatpush2.msra.mxu0 0.0
    %353 = vmatprep.subr.mxu0 0.0
    %354 = vmatpush2.msra.mxu0 0.0
    %355 = vmatprep.subr.mxu0 0.0
    %356 = vmatpush2.msra.mxu0 0.0
    %357 = vmatprep.subr.mxu0 0.0
    %358 = vmatpush2.msra.mxu0 0.0
    %359 = vmatprep.subr.mxu0 0.0
    %360 = vmatpush2.msra.mxu0 0.0
    %361 = vmatprep.subr.mxu0 0.0
    %362 = vmatpush2.msra.mxu0 0.0
    %363 = vmatprep.subr.mxu0 0.0
    %364 = vmatpush2.msra.mxu0 0.0
    %365 = vmatprep.subr.mxu0 0.0
    %366 = vmatpush2.msra.mxu0 0.0
    %367 = vmatprep.subr.mxu0 0.0
    %368 = vmatpush2.msra.mxu0 0.0
    %369 = vmatprep.subr.mxu0 0.0
    %370 = vmatpush2.msra.mxu0 0.0
    %371 = vmatprep.subr.mxu0 0.0
    %372 = vmatpush2.msra.mxu0 0.0
    %373 = vmatprep.subr.mxu0 0.0
    %374 = vmatpush2.msra.mxu0 0.0
    %375 = vmatprep.subr.mxu0 0.0
    %376 = vmatpush2.msra.mxu0 0.0
    %377 = vmatprep.subr.mxu0 0.0
    %378 = vmatpush2.msra.mxu0 0.0
    %379 = vmatprep.subr.mxu0 0.0
    %380 = vmatpush2.msra.mxu0 0.0
    %381 = vmatprep.mubr.f32.mxu0 0.0
    %382 = vmatmul.mubr.f32.gmra.mxu0 %v295
    %v383 = vpop.f32.mrf.mxu0
    %v384 = vadd.f32 %v316, %v383
    %v385 = vpop.f32.mrf.mxu0
    %386 = vdwg.mxu0
    %vm387 = vcmask 130048
    %388 = vst.msk [vmem:[#allocation5] sm:$0xff] %vm387, %v384
    // Predicated region
    $region30: #{tpu_custom_call.1} parent=1 // pred_check
      _
    $region31: #{tpu_custom_call.1} parent=1 // pred_check_branch
      %390 = sbr.rel (0) target = $region33
    $region32: #{tpu_custom_call.1} parent=1 // pred_region
      %s392 = ssub.s32 128, 128
      %393 = vsyncadd [#allocation4], %s392
      %s395 = sshll.u32 [#allocation5], 4
      %s396 = int_to_ptr.vmem [resolvable:$true] %s395
      %398 = dma.vmem_to_hbm [thread:$0]  %s396, 128, %s6, [#allocation4]
    $region33: #{tpu_custom_call.1} parent=1 // pred_fallthru
      _
    // Predicated region
    $region34: #{tpu_custom_call.1} parent=1 // pred_check
      _
    $region35: #{tpu_custom_call.1} parent=1 // pred_check_branch
      %400 = sbr.rel (0) target = $region37
    $region36: #{tpu_custom_call.1} parent=1 // pred_region
      %401 = dma.done [#allocation4], 128
    $region37: #{tpu_custom_call.1} parent=1 // pred_fallthru
      _
    %402 = vsyncpa [#allocation3], 1
    %403 = vsyncpa [#allocation4], 1

</llo_original>
